<compile_context>
chip_gen: v6e
topology: v6e:2x2x1
jax: 0.10.0
libtpu: 0.0.40
codegen_flags: <defaults>
</compile_context>

<pallas_src>
import jax
import jax.numpy as jnp
from jax.experimental import pallas as pl
from jax.experimental.pallas import tpu as pltpu


def _downsample_cat_kernel(sw_ref, x_ref, o_ref):
    # sw_ref: (2, Wp, Wo)        0/1 column-selection matrices (even cols, odd cols)
    # x_ref : (1, Cblk*Ho, 2*Wp) super-rows: [input row 2i | input row 2i+1] per channel block
    # o_ref : (1, 2, Cblk*Ho, Wo)
    wp = sw_ref.shape[1]
    rows = x_ref[0]                          # single load of the whole block
    xe = rows[:, :wp]                        # even input rows (all columns)
    xo = rows[:, wp:]                        # odd  input rows (all columns)
    o_ref[0, 0] = jnp.dot(xe, sw_ref[0],
                          preferred_element_type=jnp.float32).astype(o_ref.dtype)
    o_ref[0, 1] = jnp.dot(xo, sw_ref[1],
                          preferred_element_type=jnp.float32).astype(o_ref.dtype)


def _pick_cblk(C, Ho, Wo, Wp, itemsize, budget=8 * 1024 * 1024):
    # Double-buffered VMEM bytes per channel per grid step (input block + both parity outputs).
    per_chan = 2 * (Ho * 2 * Wp + 2 * Ho * Wo) * itemsize
    divisors = [d for d in range(1, C + 1) if C % d == 0]
    # (8,128) BlockSpec rule: second-to-last block dim must be %8==0 unless it equals the full dim.
    valid = [d for d in divisors if d == C or (d * Ho) % 8 == 0]
    fitting = [d for d in valid if d * per_chan <= budget]
    return max(fitting) if fitting else min(valid)


def downsample_cat(x):
    """Pallas implementation of DownsampleCat.forward for NCHW input."""
    N, C, H, W = x.shape
    Hp, Wp = H + (H & 1), W + (W & 1)        # pad to even (implicit ConstantPad2d zero-padding)
    Ho, Wo = Hp // 2, Wp // 2
    dt = x.dtype
    itemsize = jnp.dtype(dt).itemsize

    if (Hp, Wp) != (H, W):
        x = jnp.pad(x, ((0, 0), (0, 0), (0, Hp - H), (0, Wp - W)))

    # Free contiguous view: super-row (c*Ho + i) = [input row 2i | input row 2i+1] of channel c.
    xv = x.reshape(N, C * Ho, 2 * Wp)

    # 0/1 column-selection matrices (exact in float); index 0 -> even cols, 1 -> odd cols.
    cols = jnp.arange(Wp)[:, None]
    sel_e = (cols == 2 * jnp.arange(Wo)[None, :]).astype(dt)
    sel_o = (cols == 2 * jnp.arange(Wo)[None, :] + 1).astype(dt)
    SW = jnp.stack([sel_e, sel_o])           # (2, Wp, Wo)

    Cblk = _pick_cblk(C, Ho, Wo, Wp, itemsize)
    grid = (N, C // Cblk)

    out = pl.pallas_call(
        _downsample_cat_kernel,
        out_shape=jax.ShapeDtypeStruct((N, 2, C * Ho, Wo), dt),
        grid_spec=pltpu.PrefetchScalarGridSpec(
            num_scalar_prefetch=0,
            grid=grid,
            in_specs=[
                # selection matrices: same (full) block for every grid point -> DMA'd once
                pl.BlockSpec((2, Wp, Wo), lambda n, c: (0, 0, 0)),
                # one (batch, channel-block) slab of super-rows
                pl.BlockSpec((1, Cblk * Ho, 2 * Wp), lambda n, c: (n, c, 0)),
            ],
            out_specs=pl.BlockSpec((1, 2, Cblk * Ho, Wo), lambda n, c: (n, 0, c, 0)),
        ),
        compiler_params=pltpu.CompilerParams(
            dimension_semantics=("parallel", "parallel")),
        cost_estimate=pl.CostEstimate(
            flops=0,
            transcendentals=0,
            bytes_accessed=int((N * C * Hp * Wp + N * 2 * C * Ho * Wo) * itemsize)),
    )(SW, xv)

    # Free reshapes back to the PyTorch concat layout: (N, 2, C, Ho, Wo) -> (N, 2*C, Ho, Wo).
    return out.reshape(N, 2 * C, Ho, Wo)


if __name__ == "__main__":
    key = jax.random.PRNGKey(0)
    x = jax.random.normal(key, (2, 4, 16, 16), dtype=jnp.float32)

    y = downsample_cat(x)
    jax.block_until_ready(y)

    # Pure-JAX reference of the PyTorch forward (pad right/bottom by 1, strided slices, channel cat)
    p = jnp.pad(x, ((0, 0), (0, 0), (0, 1), (0, 1)))
    ref = jnp.concatenate([p[:, :, :-1:2, :-1:2], p[:, :, 1::2, 1::2]], axis=1)

    assert y.shape == ref.shape, (y.shape, ref.shape)
    assert jnp.allclose(y, ref, atol=1e-6), float(jnp.max(jnp.abs(y - ref)))
    print("KERNEL_OK")
</pallas_src>

<mosaic_0001>
module attributes {stable_mosaic.version = 11 : i64} {
  func.func @_downsample_cat_kernel(%arg0: i32, %arg1: i32, %arg2: memref<2x16x8xf32, #tpu.memory_space<vmem>>, %arg3: memref<1x32x32xf32, #tpu.memory_space<vmem>>, %arg4: memref<1x2x32x8xf32, #tpu.memory_space<vmem>>) attributes {dimension_semantics = [#tpu.dimension_semantics<parallel>, #tpu.dimension_semantics<parallel>], iteration_bounds = array<i64: 2, 1>, scalar_prefetch = 0 : i64, scratch_operands = 0 : i64, tpu.core_type = #tpu.core_type<tc>, window_params = [{pipeline_mode = #tpu.pipeline_mode<synchronous>, transform_indices = @transform_0, window_bounds = array<i64: 2, 16, 8>}, {transform_indices = @transform_1, window_bounds = array<i64: 1, 32, 32>}, {transform_indices = @transform_2, window_bounds = array<i64: 1, 2, 32, 8>}]} {
    %c0 = arith.constant 0 : index
    %c0_0 = arith.constant 0 : index
    %c0_1 = arith.constant 0 : index
    %0 = vector.load %arg3[%c0, %c0_0, %c0_1] : memref<1x32x32xf32, #tpu.memory_space<vmem>>, vector<1x32x32xf32>
    %1 = vector.shape_cast %0 : vector<1x32x32xf32> to vector<32x32xf32>
    %2 = vector.extract_strided_slice %1 {offsets = [0, 0], sizes = [32, 16], strides = [1, 1]} : vector<32x32xf32> to vector<32x16xf32>
    %3 = vector.extract_strided_slice %1 {offsets = [0, 16], sizes = [32, 16], strides = [1, 1]} : vector<32x32xf32> to vector<32x16xf32>
    %c0_2 = arith.constant 0 : index
    %c0_3 = arith.constant 0 : index
    %c0_4 = arith.constant 0 : index
    %4 = vector.load %arg2[%c0_2, %c0_3, %c0_4] : memref<2x16x8xf32, #tpu.memory_space<vmem>>, vector<1x16x8xf32>
    %5 = vector.shape_cast %4 : vector<1x16x8xf32> to vector<16x8xf32>
    %cst = arith.constant dense<0.000000e+00> : vector<32x8xf32>
    %6 = tpu.matmul %2, %5, %cst {dimension_numbers = #tpu.dot_dimension_numbers<[1], [0], [0], [1], [0, 0, 1, 1], [], []>} : vector<32x16xf32>, vector<16x8xf32>, vector<32x8xf32> -> vector<32x8xf32>
    %c0_5 = arith.constant 0 : index
    %c0_6 = arith.constant 0 : index
    %c0_7 = arith.constant 0 : index
    %c0_8 = arith.constant 0 : index
    %7 = vector.load %arg4[%c0_5, %c0_6, %c0_7, %c0_8] : memref<1x2x32x8xf32, #tpu.memory_space<vmem>>, vector<1x1x32x8xf32>
    %8 = vector.shape_cast %7 : vector<1x1x32x8xf32> to vector<32x8xf32>
    %9 = vector.shape_cast %6 : vector<32x8xf32> to vector<1x1x32x8xf32>
    tpu.vector_store %arg4[%c0_5, %c0_6, %c0_7, %c0_8], %9 {strides = array<i32>} : memref<1x2x32x8xf32, #tpu.memory_space<vmem>>, vector<1x1x32x8xf32>,
    %c1 = arith.constant 1 : index
    %c0_9 = arith.constant 0 : index
    %c0_10 = arith.constant 0 : index
    %10 = vector.load %arg2[%c1, %c0_9, %c0_10] : memref<2x16x8xf32, #tpu.memory_space<vmem>>, vector<1x16x8xf32>
    %11 = vector.shape_cast %10 : vector<1x16x8xf32> to vector<16x8xf32>
    %cst_11 = arith.constant dense<0.000000e+00> : vector<32x8xf32>
    %12 = tpu.matmul %3, %11, %cst_11 {dimension_numbers = #tpu.dot_dimension_numbers<[1], [0], [0], [1], [0, 0, 1, 1], [], []>} : vector<32x16xf32>, vector<16x8xf32>, vector<32x8xf32> -> vector<32x8xf32>
    %c0_12 = arith.constant 0 : index
    %c1_13 = arith.constant 1 : index
    %c0_14 = arith.constant 0 : index
    %c0_15 = arith.constant 0 : index
    %13 = vector.load %arg4[%c0_12, %c1_13, %c0_14, %c0_15] : memref<1x2x32x8xf32, #tpu.memory_space<vmem>>, vector<1x1x32x8xf32>
    %14 = vector.shape_cast %13 : vector<1x1x32x8xf32> to vector<32x8xf32>
    %15 = vector.shape_cast %12 : vector<32x8xf32> to vector<1x1x32x8xf32>
    tpu.vector_store %arg4[%c0_12, %c1_13, %c0_14, %c0_15], %15 {strides = array<i32>} : memref<1x2x32x8xf32, #tpu.memory_space<vmem>>, vector<1x1x32x8xf32>,
    return
  }
  func.func @transform_0(%arg0: i32, %arg1: i32) -> (i32, i32, i32) {
    %c0_i32 = arith.constant 0 : i32
    %c0_i32_0 = arith.constant 0 : i32
    %c0_i32_1 = arith.constant 0 : i32
    %c0_i32_2 = arith.constant 0 : i32
    return %c0_i32, %c0_i32_0, %c0_i32_1 : i32, i32, i32
  }
  func.func @transform_1(%arg0: i32, %arg1: i32) -> (i32, i32, i32) {
    %c0_i32 = arith.constant 0 : i32
    %c0_i32_0 = arith.constant 0 : i32
    return %arg0, %arg1, %c0_i32 : i32, i32, i32
  }
  func.func @transform_2(%arg0: i32, %arg1: i32) -> (i32, i32, i32, i32) {
    %c0_i32 = arith.constant 0 : i32
    %c0_i32_0 = arith.constant 0 : i32
    %c0_i32_1 = arith.constant 0 : i32
    return %arg0, %c0_i32, %arg1, %c0_i32_0 : i32, i32, i32, i32
  }
}

</mosaic_0001>

<llo_original>
// kernel: tpu_custom_call.1
$region0: #{tpu_custom_call.1}
  #allocation0 [shape = 'u32[]', space=smem, size = 0x4, offset = 0x4, fixed_abs, tag = 'smem constant byte address 0x4 - core index']
  #allocation1 [shape = 'u32[144,128]{1,0:T(1,128)}', space=vmem, size = 0x12000, scoped, tag = 'internal scratch']
  %s0 = inlined_call_operand.vmem [shape: f32[2,16,8], index: 0, kind: input, shape index: {}]
  %s1 = inlined_call_operand.hbm [shape: f32[2,32,32], index: 1, kind: input, shape index: {}]
  %s2 = inlined_call_operand.vmem [shape: f32[2,2,32,8], index: 2, kind: output, shape index: {}]
  %s3 = sld [smem:[#allocation0]]
  $region45: #{tpu_custom_call.1} parent=0
    _
  %s5 = ssub.s32 1, %s3
  %s6 = scalar_select 0, %s5, %s3
  $region1: #{tpu_custom_call.1} parent=0
    #allocation2 [shape = 'u8[32768]{0}', space=vmem, size = 0x8000, scoped, tag = 'input window, operand 1']
    #allocation3 [shape = 's32[2]{0}', space=sflag, size = 0x8, scoped, tag = 'scoped memory for tpu_custom_call.1']
    %7 = vsyncpa [#allocation3], 0
    %s8 = scalar_lea.sflag [#allocation3], 1
    %9 = vsyncpa %s8, 0
    loop: start=0, step=1, limit=4
    $region2: #{tpu_custom_call.1} parent=1 // loop_pre_header
      _
    $region3: #{tpu_custom_call.1} parent=1 // loop_header
      %s11 = sphi 0, %s15
      %p12 = scmp.ge.s32.totalorder %s11, 4
      %s18 = sphi 0, %s30
      %s19 = sphi 0, %s26
      %s20 = sphi 0, %s18
      %s21 = sphi 0, %s19
      %s22 = sphi 0, %s20
      %s23 = sphi 0, %s21
      %s31 = sphi 0, %s31
      %s33 = sphi 0, %s31
      %s34 = sphi 0, %s33
      %s48 = sphi 0, %s34
      %s56 = sphi 0, %s58
      %s59 = sphi 0, %s56
      %s60 = sphi 0, %s59
      %s76 = sphi 0, %s60
      %s84 = sphi 0, %s86
      %s87 = sphi 0, %s84
      %s88 = sphi 0, %s87
      %s104 = sphi 0, %s88
    $region4: #{tpu_custom_call.1} parent=1 // loop_header_branch
      %14 = sbr.rel (%p12) target = $region8
    $region5: #{tpu_custom_call.1} parent=1 // loop_body
      %s16 = ssub.s32 %s11, 1
      %s17 = ssub.s32 %s11, 2
      %s24 = sadd.s32 1, %s19
      %p25 = scmp.ge.s32.totalorder %s24, 1
      %s26 = scalar_select %p25, 0, %s24
      %s27 = sadd.s32 1, %s18
      %s28 = scalar_select %p25, %s27, %s18
      %p29 = scmp.ge.s32.totalorder %s28, 2
      %s30 = scalar_select %p29, 0, %s28
      %s32 = sadd.s32 %s31, 1
      %p35 = scmp.eq.s32.totalorder %s11, 1
      %p36 = scmp.ne.s32.totalorder %s31, %s33
      %p37 = scmp.eq.s32.totalorder %s11, 0
      %p38 = por %p36, %p37
      %p39 = scmp.ne.s32.totalorder %s31, %s33
      %p40 = scmp.eq.s32.totalorder %s16, 1
      %p41 = por %p39, %p40
      %p42 = scmp.ne.s32.totalorder %s33, %s34
      %p43 = scmp.eq.s32.totalorder %s16, 0
      %p44 = por %p42, %p43
      %p45 = scmp.ne.s32.totalorder %s33, %s34
      %p46 = scmp.eq.s32.totalorder %s17, 1
      %p47 = por %p45, %p46
      %p49 = scmp.ne.s32.totalorder %s34, %s48
      %p50 = scmp.eq.s32.totalorder %s17, 0
      %p51 = por %p49, %p50
      %s52 = ssub.s32 %s18, %s30
      %s53 = ssub.s32 %s19, %s26
      %s54 = sor.u32 %s52, %s53
      %p55 = scmp.eq.s32.totalorder %s54, 0
      %s57 = sadd.s32 %s56, 1
      %s58 = scalar_select %p55, %s56, %s57
      %p61 = pneg %p55
      %p62 = scmp.eq.s32.totalorder %s11, 1
      %p63 = por %p61, %p62
      %p64 = scmp.ne.s32.totalorder %s56, %s59
      %p65 = scmp.eq.s32.totalorder %s11, 0
      %p66 = por %p64, %p65
      %p67 = scmp.ne.s32.totalorder %s56, %s59
      %p68 = scmp.eq.s32.totalorder %s16, 1
      %p69 = por %p67, %p68
      %p70 = scmp.ne.s32.totalorder %s59, %s60
      %p71 = scmp.eq.s32.totalorder %s16, 0
      %p72 = por %p70, %p71
      %p73 = scmp.ne.s32.totalorder %s59, %s60
      %p74 = scmp.eq.s32.totalorder %s17, 1
      %p75 = por %p73, %p74
      %p77 = scmp.ne.s32.totalorder %s60, %s76
      %p78 = scmp.eq.s32.totalorder %s17, 0
      %p79 = por %p77, %p78
      %s80 = ssub.s32 %s18, %s30
      %s81 = ssub.s32 %s19, %s26
      %s82 = sor.u32 %s80, %s81
      %p83 = scmp.eq.s32.totalorder %s82, 0
      %s85 = sadd.s32 %s84, 1
      %s86 = scalar_select %p83, %s84, %s85
      %p89 = pneg %p83
      %p90 = scmp.eq.s32.totalorder %s11, 1
      %p91 = por %p89, %p90
      %p92 = scmp.ne.s32.totalorder %s84, %s87
      %p93 = scmp.eq.s32.totalorder %s11, 0
      %p94 = por %p92, %p93
      %p95 = scmp.ne.s32.totalorder %s84, %s87
      %p96 = scmp.eq.s32.totalorder %s16, 1
      %p97 = por %p95, %p96
      %p98 = scmp.ne.s32.totalorder %s87, %s88
      %p99 = scmp.eq.s32.totalorder %s16, 0
      %p100 = por %p98, %p99
      %p101 = scmp.ne.s32.totalorder %s87, %s88
      %p102 = scmp.eq.s32.totalorder %s17, 1
      %p103 = por %p101, %p102
      %p105 = scmp.ne.s32.totalorder %s88, %s104
      %p106 = scmp.eq.s32.totalorder %s17, 0
      %p107 = por %p105, %p106
      %p108 = scmp.le.s32.totalorder 1, %s11
      %p109 = scmp.lt.s32.totalorder %s11, 3
      %p110 = pnand %p108, %p109
      %p111 = pneg %p110
      // Predicated region
      $region9: #{tpu_custom_call.1} parent=5 // pred_check
        _
      $region10: #{tpu_custom_call.1} parent=5 // pred_check_branch
        %113 = sbr.rel (%p110) target = $region12
      $region11: #{tpu_custom_call.1} parent=5 // pred_region
        %s114 = ssub.s32 %s11, 1
        // Predicated region
        $region13: #{tpu_custom_call.1} parent=11 // pred_check
          %p115 = pneg %p44
        $region14: #{tpu_custom_call.1} parent=11 // pred_check_branch
          %117 = sbr.rel (%p115) target = $region16
        $region15: #{tpu_custom_call.1} parent=11 // pred_region
          _
        $region16: #{tpu_custom_call.1} parent=11 // pred_fallthru
          _
      $region12: #{tpu_custom_call.1} parent=5 // pred_fallthru
        _
      %p118 = scmp.lt.s32.totalorder %s11, 2
      // Predicated region
      $region17: #{tpu_custom_call.1} parent=5 // pred_check
        %p119 = pneg %p118
      $region18: #{tpu_custom_call.1} parent=5 // pred_check_branch
        %121 = sbr.rel (%p119) target = $region20
      $region19: #{tpu_custom_call.1} parent=5 // pred_region
        // Predicated region
        $region21: #{tpu_custom_call.1} parent=19 // pred_check
          %p122 = pneg %p66
        $region22: #{tpu_custom_call.1} parent=19 // pred_check_branch
          %124 = sbr.rel (%p122) target = $region24
        $region23: #{tpu_custom_call.1} parent=19 // pred_region
          %s125 = sand.u32 %s56, 1
          %s126 = scalar_lea.sflag [#allocation3], %s125
          %s127 = sand.u32 %s56, 1
          %s128 = smul.addr %s127, 32
          %s129 = scalar_lea.vmem [#allocation2], %s128
          %s130 = smul.u32 4, %s19
          %s132 = ssub.s32 512, 512
          %133 = vsyncadd %s126, %s132
          %s134 = smul.addr %s18, 4
          %s135 = sadd.s32 %s130, %s134
          %s136 = smul.addr %s135, 128
          %s137 = scalar_lea.hbm %s1, %s136
          %s138 = sshll.u32 %s129, 4
          %s139 = int_to_ptr.vmem [resolvable:$true] %s138
          %144 = dma.hbm_to_vmem [thread:$0]  %s137, 512, %s139, %s126, 128, 128, 8
        $region24: #{tpu_custom_call.1} parent=19 // pred_fallthru
          _
      $region20: #{tpu_custom_call.1} parent=5 // pred_fallthru
        _
      %p145 = scmp.le.s32.totalorder 1, %s11
      %p146 = scmp.lt.s32.totalorder %s11, 3
      %p147 = pnand %p145, %p146
      %p148 = pneg %p147
      // Predicated region
      $region25: #{tpu_custom_call.1} parent=5 // pred_check
        _
      $region26: #{tpu_custom_call.1} parent=5 // pred_check_branch
        %150 = sbr.rel (%p147) target = $region28
      $region27: #{tpu_custom_call.1} parent=5 // pred_region
        %s151 = ssub.s32 %s11, 1
        %s152 = sand.u32 %s59, 1
        %s153 = scalar_lea.sflag [#allocation3], %s152
        %s154 = sand.u32 %s59, 1
        %s155 = smul.addr %s154, 32
        %s156 = scalar_lea.vmem [#allocation2], %s155
        // Predicated region
        $region29: #{tpu_custom_call.1} parent=27 // pred_check
          %p157 = pneg %p72
        $region30: #{tpu_custom_call.1} parent=27 // pred_check_branch
          %159 = sbr.rel (%p157) target = $region32
        $region31: #{tpu_custom_call.1} parent=27 // pred_region
          %160 = dma.done %s153, 512
        $region32: #{tpu_custom_call.1} parent=27 // pred_fallthru
          _
        %p161 = pneg %p44
        %p162 = pneg %p41
        %s163 = sand.u32 %s59, 1
        %s164 = scalar_lea.sflag [#allocation3], %s163
        %s165 = sand.u32 %s59, 1
        %s166 = smul.addr %s165, 32
        %s167 = scalar_lea.vmem [#allocation2], %s166
        %p168 = pneg %p72
        %p169 = pneg %p69
        %p170 = pneg %p100
        %p171 = pneg %p97
        %s172 = smul.u32 4, %s21
        %p173 = scmp.lt.s32.totalorder %s20, 1
        %s174 = scalar_select %p173, %s20, 1
        %p175 = scmp.lt.s32.totalorder %s172, 3
        %s176 = scalar_select %p175, %s172, 3
        %s177 = smul.addr %s174, 8
        %s178 = sadd.s32 %s176, %s177
        %s179 = smul.addr %s178, 8
        %s180 = scalar_lea.vmem %s2, %s179
        %s181 = smul.u32 4, %s21
        %s182 = smul.u32 4, %s21
        %p183 = scmp.lt.s32.totalorder %s20, 1
        %s184 = scalar_select %p183, %s20, 1
        %p185 = scmp.lt.s32.totalorder %s182, 3
        %s186 = scalar_select %p185, %s182, 3
        %s187 = smul.addr %s184, 8
        %s188 = sadd.s32 %s186, %s187
        %s189 = smul.addr %s188, 8
        %s190 = scalar_lea.vmem %s2, %s189
        %s191 = smul.u32 4, %s21
        %v192 = vld [vmem:[%s156] sm:$0xff]
        %v193 = vld [vmem:[%s156 + $0x8] sm:$0xff]
        %v194 = vld [vmem:[%s156 + $0x10] sm:$0xff]
        %v195 = vld [vmem:[%s156 + $0x18] sm:$0xff]
        %v196 = vld [vmem:[%s0] sm:$0xff]
        %v197 = vld [vmem:[%s0 + $0x8] sm:$0xff]
        %vm198 = vcmask 130048
        %v200 = vsel %vm198, %v192, 0
        %v203 = vsel %vm198, %v193, 0
        %v206 = vsel %vm198, %v194, 0
        %v209 = vsel %vm198, %v195, 0
        %211 = vmatprep.subr.mxu0 0.0
        %212 = vmatpush1.msra.mxu0 0.0
        %213 = vmatprep.subr.mxu0 0.0
        %214 = vmatpush1.msra.mxu0 0.0
        %215 = vmatprep.subr.mxu0 0.0
        %216 = vmatpush1.msra.mxu0 0.0
        %217 = vmatprep.subr.mxu0 0.0
        %218 = vmatpush1.msra.mxu0 0.0
        %219 = vmatprep.subr.mxu0 0.0
        %220 = vmatpush1.msra.mxu0 0.0
        %221 = vmatprep.subr.mxu0 0.0
        %222 = vmatpush1.msra.mxu0 0.0
        %223 = vmatprep.subr.mxu0 0.0
        %224 = vmatpush1.msra.mxu0 0.0
        %225 = vmatprep.subr.mxu0 0.0
        %226 = vmatpush1.msra.mxu0 0.0
        %227 = vmatprep.subr.mxu0 0.0
        %228 = vmatpush1.msra.mxu0 0.0
        %229 = vmatprep.subr.mxu0 0.0
        %230 = vmatpush1.msra.mxu0 0.0
        %231 = vmatprep.subr.mxu0 0.0
        %232 = vmatpush1.msra.mxu0 0.0
        %233 = vmatprep.subr.mxu0 0.0
        %234 = vmatpush1.msra.mxu0 0.0
        %235 = vmatprep.subr.mxu0 0.0
        %236 = vmatpush1.msra.mxu0 0.0
        %237 = vmatprep.subr.mxu0 0.0
        %238 = vmatpush1.msra.mxu0 0.0
        %239 = vmatprep.subr.mxu0 0.0
        %240 = vmatpush1.msra.mxu0 %v197
        %241 = vmatprep.subr.mxu0 0.0
        %242 = vmatpush1.msra.mxu0 %v196
        %243 = vmatprep.subr.mxu0 0.0
        %244 = vmatpush2.msra.mxu0 0.0
        %245 = vmatprep.subr.mxu0 0.0
        %246 = vmatpush2.msra.mxu0 0.0
        %247 = vmatprep.subr.mxu0 0.0
        %248 = vmatpush2.msra.mxu0 0.0
        %249 = vmatprep.subr.mxu0 0.0
        %250 = vmatpush2.msra.mxu0 0.0
        %251 = vmatprep.subr.mxu0 0.0
        %252 = vmatpush2.msra.mxu0 0.0
        %253 = vmatprep.subr.mxu0 0.0
        %254 = vmatpush2.msra.mxu0 0.0
        %255 = vmatprep.subr.mxu0 0.0
        %256 = vmatpush2.msra.mxu0 0.0
        %257 = vmatprep.subr.mxu0 0.0
        %258 = vmatpush2.msra.mxu0 0.0
        %259 = vmatprep.subr.mxu0 0.0
        %260 = vmatpush2.msra.mxu0 0.0
        %261 = vmatprep.subr.mxu0 0.0
        %262 = vmatpush2.msra.mxu0 0.0
        %263 = vmatprep.subr.mxu0 0.0
        %264 = vmatpush2.msra.mxu0 0.0
        %265 = vmatprep.subr.mxu0 0.0
        %266 = vmatpush2.msra.mxu0 0.0
        %267 = vmatprep.subr.mxu0 0.0
        %268 = vmatpush2.msra.mxu0 0.0
        %269 = vmatprep.subr.mxu0 0.0
        %270 = vmatpush2.msra.mxu0 0.0
        %271 = vmatprep.subr.mxu0 0.0
        %272 = vmatpush2.msra.mxu0 0.0
        %273 = vmatprep.subr.mxu0 0.0
        %274 = vmatpush2.msra.mxu0 0.0
        %275 = vmatprep.mubr.f32.mxu0 0.0
        %276 = vmatmul.mubr.f32.gmra.mxu0 %v200
        %v277 = vpop.f32.mrf.mxu0
        %v278 = vadd.f32 0.0, %v277
        %v279 = vpop.f32.mrf.mxu0
        %280 = vmatprep.mubr.f32.mxu0 0.0
        %281 = vmatmul.mubr.f32.gmra.mxu0 %v203
        %v282 = vpop.f32.mrf.mxu0
        %v283 = vadd.f32 0.0, %v282
        %v284 = vpop.f32.mrf.mxu0
        %285 = vmatprep.mubr.f32.mxu0 0.0
        %286 = vmatmul.mubr.f32.gmra.mxu0 %v206
        %v287 = vpop.f32.mrf.mxu0
        %v288 = vadd.f32 0.0, %v287
        %v289 = vpop.f32.mrf.mxu0
        %290 = vmatprep.mubr.f32.mxu0 0.0
        %291 = vmatmul.mubr.f32.gmra.mxu0 %v209
        %v292 = vpop.f32.mrf.mxu0
        %v293 = vadd.f32 0.0, %v292
        %v294 = vpop.f32.mrf.mxu0
        %295 = vdwg.mxu0
        %vm296 = vcmask 64512
        %297 = vst.msk [vmem:[%s190] sm:$0xff] %vm296, %v278
        %298 = vst.msk [vmem:[%s190 + $0x8] sm:$0xff] %vm296, %v283
        %299 = vst.msk [vmem:[%s190 + $0x10] sm:$0xff] %vm296, %v288
        %300 = vst.msk [vmem:[%s190 + $0x18] sm:$0xff] %vm296, %v293
        %s301 = scalar_lea.vmem %s0, 16
        %v302 = vld [vmem:[%s301] sm:$0xff]
        %v303 = vld [vmem:[%s301 + $0x8] sm:$0xff]
        %304 = vrot.lane.b32.xlu0 %v192, 112
        %v305 = vpop.permute.xlu0 %304
        %306 = vrot.lane.b32.xlu0 %v193, 112
        %v307 = vpop.permute.xlu0 %306
        %308 = vrot.lane.b32.xlu0 %v194, 112
        %v309 = vpop.permute.xlu0 %308
        %310 = vrot.lane.b32.xlu0 %v195, 112
        %v311 = vpop.permute.xlu0 %310
        %v312 = vsel %vm198, %v305, 0
        %v314 = vsel %vm198, %v307, 0
        %v316 = vsel %vm198, %v309, 0
        %v318 = vsel %vm198, %v311, 0
        %320 = vmatprep.subr.mxu0 0.0
        %321 = vmatpush1.msra.mxu0 0.0
        %322 = vmatprep.subr.mxu0 0.0
        %323 = vmatpush1.msra.mxu0 0.0
        %324 = vmatprep.subr.mxu0 0.0
        %325 = vmatpush1.msra.mxu0 0.0
        %326 = vmatprep.subr.mxu0 0.0
        %327 = vmatpush1.msra.mxu0 0.0
        %328 = vmatprep.subr.mxu0 0.0
        %329 = vmatpush1.msra.mxu0 0.0
        %330 = vmatprep.subr.mxu0 0.0
        %331 = vmatpush1.msra.mxu0 0.0
        %332 = vmatprep.subr.mxu0 0.0
        %333 = vmatpush1.msra.mxu0 0.0
        %334 = vmatprep.subr.mxu0 0.0
        %335 = vmatpush1.msra.mxu0 0.0
        %336 = vmatprep.subr.mxu0 0.0
        %337 = vmatpush1.msra.mxu0 0.0
        %338 = vmatprep.subr.mxu0 0.0
        %339 = vmatpush1.msra.mxu0 0.0
        %340 = vmatprep.subr.mxu0 0.0
        %341 = vmatpush1.msra.mxu0 0.0
        %342 = vmatprep.subr.mxu0 0.0
        %343 = vmatpush1.msra.mxu0 0.0
        %344 = vmatprep.subr.mxu0 0.0
        %345 = vmatpush1.msra.mxu0 0.0
        %346 = vmatprep.subr.mxu0 0.0
        %347 = vmatpush1.msra.mxu0 0.0
        %348 = vmatprep.subr.mxu0 0.0
        %349 = vmatpush1.msra.mxu0 %v303
        %350 = vmatprep.subr.mxu0 0.0
        %351 = vmatpush1.msra.mxu0 %v302
        %352 = vmatprep.subr.mxu0 0.0
        %353 = vmatpush2.msra.mxu0 0.0
        %354 = vmatprep.subr.mxu0 0.0
        %355 = vmatpush2.msra.mxu0 0.0
        %356 = vmatprep.subr.mxu0 0.0
        %357 = vmatpush2.msra.mxu0 0.0
        %358 = vmatprep.subr.mxu0 0.0
        %359 = vmatpush2.msra.mxu0 0.0
        %360 = vmatprep.subr.mxu0 0.0
        %361 = vmatpush2.msra.mxu0 0.0
        %362 = vmatprep.subr.mxu0 0.0
        %363 = vmatpush2.msra.mxu0 0.0
        %364 = vmatprep.subr.mxu0 0.0
        %365 = vmatpush2.msra.mxu0 0.0
        %366 = vmatprep.subr.mxu0 0.0
        %367 = vmatpush2.msra.mxu0 0.0
        %368 = vmatprep.subr.mxu0 0.0
        %369 = vmatpush2.msra.mxu0 0.0
        %370 = vmatprep.subr.mxu0 0.0
        %371 = vmatpush2.msra.mxu0 0.0
        %372 = vmatprep.subr.mxu0 0.0
        %373 = vmatpush2.msra.mxu0 0.0
        %374 = vmatprep.subr.mxu0 0.0
        %375 = vmatpush2.msra.mxu0 0.0
        %376 = vmatprep.subr.mxu0 0.0
        %377 = vmatpush2.msra.mxu0 0.0
        %378 = vmatprep.subr.mxu0 0.0
        %379 = vmatpush2.msra.mxu0 0.0
        %380 = vmatprep.subr.mxu0 0.0
        %381 = vmatpush2.msra.mxu0 0.0
        %382 = vmatprep.subr.mxu0 0.0
        %383 = vmatpush2.msra.mxu0 0.0
        %384 = vmatprep.mubr.f32.mxu0 0.0
        %385 = vmatmul.mubr.f32.gmra.mxu0 %v312
        %v386 = vpop.f32.mrf.mxu0
        %v387 = vadd.f32 0.0, %v386
        %v388 = vpop.f32.mrf.mxu0
        %389 = vmatprep.mubr.f32.mxu0 0.0
        %390 = vmatmul.mubr.f32.gmra.mxu0 %v314
        %v391 = vpop.f32.mrf.mxu0
        %v392 = vadd.f32 0.0, %v391
        %v393 = vpop.f32.mrf.mxu0
        %394 = vmatprep.mubr.f32.mxu0 0.0
        %395 = vmatmul.mubr.f32.gmra.mxu0 %v316
        %v396 = vpop.f32.mrf.mxu0
        %v397 = vadd.f32 0.0, %v396
        %v398 = vpop.f32.mrf.mxu0
        %399 = vmatprep.mubr.f32.mxu0 0.0
        %400 = vmatmul.mubr.f32.gmra.mxu0 %v318
        %v401 = vpop.f32.mrf.mxu0
        %v402 = vadd.f32 0.0, %v401
        %v403 = vpop.f32.mrf.mxu0
        %404 = vdwg.mxu0
        %s405 = scalar_lea.vmem %s190, 32
        %406 = vst.msk [vmem:[%s405] sm:$0xff] %vm296, %v387
        %407 = vst.msk [vmem:[%s405 + $0x8] sm:$0xff] %vm296, %v392
        %408 = vst.msk [vmem:[%s405 + $0x10] sm:$0xff] %vm296, %v397
        %409 = vst.msk [vmem:[%s405 + $0x18] sm:$0xff] %vm296, %v402
        %s410 = smul.u32 4, %s21
        %p411 = scmp.lt.s32.totalorder %s20, 1
        %s412 = scalar_select %p411, %s20, 1
        %p413 = scmp.lt.s32.totalorder %s410, 3
        %s414 = scalar_select %p413, %s410, 3
        %s415 = smul.addr %s412, 8
        %s416 = sadd.s32 %s414, %s415
        %s417 = smul.addr %s416, 8
        %s418 = scalar_lea.vmem %s2, %s417
        // Predicated region
        $region33: #{tpu_custom_call.1} parent=27 // pred_check
          %p419 = pneg %p97
        $region34: #{tpu_custom_call.1} parent=27 // pred_check_branch
          %421 = sbr.rel (%p419) target = $region36
        $region35: #{tpu_custom_call.1} parent=27 // pred_region
          %s422 = smul.u32 4, %s21
        $region36: #{tpu_custom_call.1} parent=27 // pred_fallthru
          _
      $region28: #{tpu_custom_call.1} parent=5 // pred_fallthru
        _
      %p423 = scmp.le.s32.totalorder 2, %s11
      // Predicated region
      $region37: #{tpu_custom_call.1} parent=5 // pred_check
        %p424 = pneg %p423
      $region38: #{tpu_custom_call.1} parent=5 // pred_check_branch
        %426 = sbr.rel (%p424) target = $region40
      $region39: #{tpu_custom_call.1} parent=5 // pred_region
        %s427 = ssub.s32 %s11, 2
        // Predicated region
        $region41: #{tpu_custom_call.1} parent=39 // pred_check
          %p428 = pneg %p103
        $region42: #{tpu_custom_call.1} parent=39 // pred_check_branch
          %430 = sbr.rel (%p428) target = $region44
        $region43: #{tpu_custom_call.1} parent=39 // pred_region
          %s431 = smul.u32 4, %s23
          %p432 = scmp.lt.s32.totalorder %s22, 1
          %s433 = scalar_select %p432, %s22, 1
          %p434 = scmp.lt.s32.totalorder %s431, 3
          %s435 = scalar_select %p434, %s431, 3
          %s436 = smul.addr %s433, 8
          %s437 = sadd.s32 %s435, %s436
          %s438 = smul.addr %s437, 8
          %s439 = scalar_lea.vmem %s2, %s438
        $region44: #{tpu_custom_call.1} parent=39 // pred_fallthru
          _
      $region40: #{tpu_custom_call.1} parent=5 // pred_fallthru
        _
    $region6: #{tpu_custom_call.1} parent=1 // loop_footer
      %s15 = sadd.s32 1, %s11
    $region7: #{tpu_custom_call.1} parent=1 // loop_footer_branch
      %10 = sbr.rel target = $region3
    $region8: #{tpu_custom_call.1} parent=1 // loop_exit
      _
    %440 = vsyncpa [#allocation3], 1
    %s441 = scalar_lea.sflag [#allocation3], 1
    %442 = vsyncpa %s441, 1

</llo_original>
